<compile_context>
chip_gen: v6e
topology: v6e:2x2x1
jax: 0.10.0
libtpu: 0.0.40
codegen_flags: <defaults>
</compile_context>

<pallas_src>
import functools

import jax
import jax.numpy as jnp
import numpy as np
from jax.experimental import pallas as pl
from jax.experimental.pallas import tpu as pltpu


def _round_up(a, b):
    return (a + b - 1) // b * b


def _cdiv(a, b):
    return (a + b - 1) // b


_VMEM_TILE_BUDGET = 24 * 1024 * 1024  # double-buffered working-set target


def _vmem_bytes(tm, tn, tk, x_bytes, w_bytes, o_bytes):
    # 2x double-buffered x / w / bias input blocks + the resident output block
    # (counted twice to stay conservative about output buffering).
    return (2 * tm * tk * x_bytes + 2 * tk * tn * w_bytes
            + 2 * tn * 4 + 2 * tm * tn * o_bytes)


def _select_tiles(m, k, n, x_bytes, w_bytes, o_bytes):
    """Pick (tm, tn, tk) under the VMEM budget, biased to minimize HBM re-reads."""

    def fits(tm, tn, tk):
        return _vmem_bytes(tm, tn, tk, x_bytes, w_bytes, o_bytes) <= _VMEM_TILE_BUDGET

    def pick(dim, target):
        # Full-extent block if the dim fits in one target tile (always a legal
        # block shape), otherwise the (8/128-aligned) target.
        return dim if dim <= target else target

    tm = pick(m, 512)
    tn = pick(n, 1024)
    tk = pick(k, 1024)

    def grow(tile, dim):
        if tile >= dim:
            return tile
        new = tile * 2
        return dim if new >= dim else new

    # Weight re-reads scale with ceil(M/tm) -> grow tm first; x re-reads scale
    # with ceil(N/tn) -> tn next; bigger tk just amortizes grid-step overhead.
    for _ in range(8):
        t = grow(tm, m)
        if t == tm or not fits(t, tn, tk):
            break
        tm = t
    for _ in range(8):
        t = grow(tn, n)
        if t == tn or not fits(tm, t, tk):
            break
        tn = t
    for _ in range(8):
        t = grow(tk, k)
        if t == tk or not fits(tm, tn, t):
            break
        tk = t

    # v7x megacore: expose >= 2 blocks on a parallel axis for big single-block
    # grids so both TensorCores get work.
    if (_cdiv(m, tm) == 1 and _cdiv(n, tn) == 1
            and n >= 256 and m * n >= (1 << 18)):
        tn = _round_up(_cdiv(n, 2), 128)

    return tm, tn, tk


def _linear_kernel(x_ref, w_ref, b_ref, o_ref, *, k_dim, tk, mask_k):
    # x_ref: (tm, tk)   w_ref: (tk, tn)   b_ref: (1, tn)   o_ref: (tm, tn) f32
    k = pl.program_id(2)

    @pl.when(k == 0)
    def _():
        # Init the resident (f32) output block with the bias: added exactly once.
        o_ref[...] = jnp.broadcast_to(b_ref[...].astype(o_ref.dtype),
                                      o_ref.shape)

    x = x_ref[...]
    w = w_ref[...]
    if mask_k:
        # Ragged K tail: the last K-block partially overhangs the arrays and
        # its out-of-bounds contents are undefined -> zero those columns/rows
        # so they contribute 0 to the accumulation.  For non-final K steps the
        # mask is all-true (valid >= tk), so this stays correct on every step.
        valid = k_dim - k * tk
        x = jnp.where(jax.lax.broadcasted_iota(jnp.int32, x.shape, 1) < valid,
                      x, jnp.zeros_like(x))
        w = jnp.where(jax.lax.broadcasted_iota(jnp.int32, w.shape, 0) < valid,
                      w, jnp.zeros_like(w))

    o_ref[...] += jnp.dot(x, w, preferred_element_type=jnp.float32)


def prepare_params(weight, bias, *, use_bf16=False):
    """One-time parameter prep (hoists the bf16 weight cast out of the hot path)."""
    weight = jnp.asarray(weight)
    bias = jnp.asarray(bias, dtype=jnp.float32)
    if use_bf16:
        weight = weight.astype(jnp.bfloat16)
    return weight, bias


def sparse_input_linear(x, weight, bias, *, use_bf16=False,
                        tm=None, tn=None, tk=None):
    """Computes x @ weight + bias (f32 output) with a tiled Pallas TPU kernel.

    x: (M, K), weight: (K, N), bias: (N,) -> (M, N) f32.
    """
    m, k_dim = x.shape
    k2, n = weight.shape
    assert k_dim == k2, "inner dims must match"

    if use_bf16:
        # Only cast if the caller did not pre-cast (see prepare_params()).
        if x.dtype != jnp.bfloat16:
            x = x.astype(jnp.bfloat16)
        if weight.dtype != jnp.bfloat16:
            weight = weight.astype(jnp.bfloat16)

    x_bytes = x.dtype.itemsize
    w_bytes = weight.dtype.itemsize
    out_dtype = jnp.float32  # module semantics: f32 output
    o_bytes = 4

    atm, atn, atk = _select_tiles(m, k_dim, n, x_bytes, w_bytes, o_bytes)
    tm = atm if tm is None else min(tm, m)
    tn = atn if tn is None else min(tn, n)
    tk = atk if tk is None else min(tk, k_dim)

    grid = (_cdiv(m, tm), _cdiv(n, tn), _cdiv(k_dim, tk))
    mask_k = (k_dim % tk) != 0

    bias2d = bias.reshape(1, n)

    vmem_used = _vmem_bytes(tm, tn, tk, x_bytes, w_bytes, o_bytes)
    vmem_limit = min(max(int(vmem_used * 1.5) + (2 << 20), 32 << 20), 56 << 20)

    cost = pl.CostEstimate(
        flops=2 * m * k_dim * n,
        transcendentals=0,
        bytes_accessed=(x_bytes * m * k_dim * grid[1]      # x re-read per N block
                        + w_bytes * k_dim * n * grid[0]    # W re-read per M block
                        + o_bytes * m * n + 4 * n),
    )

    kernel = functools.partial(_linear_kernel, k_dim=k_dim, tk=tk, mask_k=mask_k)

    return pl.pallas_call(
        kernel,
        out_shape=jax.ShapeDtypeStruct((m, n), out_dtype),
        grid_spec=pltpu.PrefetchScalarGridSpec(
            num_scalar_prefetch=0,
            grid=grid,
            in_specs=[
                pl.BlockSpec((tm, tk), lambda i, j, k: (i, k)),   # x tile
                pl.BlockSpec((tk, tn), lambda i, j, k: (k, j)),   # weight tile
                pl.BlockSpec((1, tn), lambda i, j, k: (0, j)),    # bias tile
            ],
            out_specs=pl.BlockSpec((tm, tn), lambda i, j, k: (i, j)),
        ),
        compiler_params=pltpu.CompilerParams(
            dimension_semantics=("parallel", "parallel", "arbitrary"),
            vmem_limit_bytes=vmem_limit,
        ),
        cost_estimate=cost,
    )(x, weight, bias2d)


def init_params(key, inp_dim, out_dim):
    # Mirrors reset_parameters(): uniform(-stdv, stdv), stdv = 1/sqrt(out_dim)
    stdv = 1.0 / np.sqrt(out_dim)
    kw, kb = jax.random.split(key)
    weight = jax.random.uniform(
        kw, (inp_dim, out_dim), dtype=jnp.float32, minval=-stdv, maxval=stdv)
    bias = jax.random.uniform(
        kb, (out_dim,), dtype=jnp.float32, minval=-stdv, maxval=stdv)
    return weight, bias


if __name__ == "__main__":
    key = jax.random.PRNGKey(0)
    k_x, k_p = jax.random.split(key)

    # 1) Small demo shapes matching the module's forward (x: (rows, inp_dim)).
    num_rows, inp_dim, out_dim = 16, 32, 64
    x = jax.random.normal(k_x, (num_rows, inp_dim), dtype=jnp.float32)
    weight, bias = init_params(k_p, inp_dim, out_dim)
    y = jax.block_until_ready(sparse_input_linear(x, weight, bias))
    ref = np.asarray(x) @ np.asarray(weight) + np.asarray(bias)
    np.testing.assert_allclose(np.asarray(y), ref, rtol=1e-5, atol=1e-5)

    # 2) Ragged M/N/K with forced small tiles: exercises partial edge blocks
    #    on M and N plus the in-kernel ragged-K mask and multi-step accumulate.
    m2, k2, n2 = 300, 200, 192
    x2 = jax.random.normal(jax.random.PRNGKey(1), (m2, k2), dtype=jnp.float32)
    w2, b2 = init_params(jax.random.PRNGKey(2), k2, n2)
    ref2 = np.asarray(x2) @ np.asarray(w2) + np.asarray(b2)
    y2 = jax.block_until_ready(
        sparse_input_linear(x2, w2, b2, tm=128, tn=128, tk=128))
    np.testing.assert_allclose(np.asarray(y2), ref2, rtol=1e-4, atol=1e-4)

    # 3) Same ragged shapes with auto tiling (full-extent single blocks).
    y2b = jax.block_until_ready(sparse_input_linear(x2, w2, b2))
    np.testing.assert_allclose(np.asarray(y2b), ref2, rtol=1e-4, atol=1e-4)

    # 4) bf16 MXU inputs (weight pre-cast once), f32 accumulate, ragged K tail.
    m3, k3, n3 = 64, 1200, 256
    x3 = jax.random.normal(jax.random.PRNGKey(3), (m3, k3), dtype=jnp.float32)
    w3, b3 = init_params(jax.random.PRNGKey(4), k3, n3)
    ref3 = np.asarray(x3) @ np.asarray(w3) + np.asarray(b3)
    w3_bf16, b3_f32 = prepare_params(w3, b3, use_bf16=True)
    y3 = jax.block_until_ready(
        sparse_input_linear(x3, w3_bf16, b3_f32, use_bf16=True, tk=512))
    np.testing.assert_allclose(np.asarray(y3), ref3, rtol=2e-2, atol=2e-2)

    print("KERNEL_OK")
</pallas_src>

<mosaic_0001>
module attributes {stable_mosaic.version = 11 : i64} {
  func.func @_linear_kernel(%arg0: i32, %arg1: i32, %arg2: i32, %arg3: memref<16x32xf32, #tpu.memory_space<vmem>>, %arg4: memref<32x64xf32, #tpu.memory_space<vmem>>, %arg5: memref<1x64xf32, #tpu.memory_space<vmem>>, %arg6: memref<16x64xf32, #tpu.memory_space<vmem>>) attributes {dimension_semantics = [#tpu.dimension_semantics<parallel>, #tpu.dimension_semantics<parallel>, #tpu.dimension_semantics<arbitrary>], iteration_bounds = array<i64: 1, 1, 1>, scalar_prefetch = 0 : i64, scratch_operands = 0 : i64, tpu.core_type = #tpu.core_type<tc>, window_params = [{transform_indices = @transform_0, window_bounds = array<i64: 16, 32>}, {transform_indices = @transform_1, window_bounds = array<i64: 32, 64>}, {transform_indices = @transform_2, window_bounds = array<i64: 1, 64>}, {transform_indices = @transform_3, window_bounds = array<i64: 16, 64>}]} {
    %c0_i32 = arith.constant 0 : i32
    %0 = arith.cmpi eq, %arg2, %c0_i32 : i32
    %1 = arith.extui %0 : i1 to i32
    %c0_i32_0 = arith.constant 0 : i32
    %2 = arith.cmpi ne, %1, %c0_i32_0 : i32
    scf.if %2 {
      %c0_8 = arith.constant 0 : index
      %c0_9 = arith.constant 0 : index
      %9 = vector.load %arg5[%c0_8, %c0_9] : memref<1x64xf32, #tpu.memory_space<vmem>>, vector<1x64xf32>
      %10 = vector.shape_cast %9 : vector<1x64xf32> to vector<1x64xf32>
      %11 = vector.broadcast %10 : vector<1x64xf32> to vector<16x64xf32>
      %c0_10 = arith.constant 0 : index
      %c0_11 = arith.constant 0 : index
      %12 = vector.load %arg6[%c0_10, %c0_11] : memref<16x64xf32, #tpu.memory_space<vmem>>, vector<16x64xf32>
      tpu.vector_store %arg6[%c0_10, %c0_11], %11 {strides = array<i32>} : memref<16x64xf32, #tpu.memory_space<vmem>>, vector<16x64xf32>,
    } else {
    }
    %c0 = arith.constant 0 : index
    %c0_1 = arith.constant 0 : index
    %3 = vector.load %arg3[%c0, %c0_1] : memref<16x32xf32, #tpu.memory_space<vmem>>, vector<16x32xf32>
    %c0_2 = arith.constant 0 : index
    %c0_3 = arith.constant 0 : index
    %4 = vector.load %arg4[%c0_2, %c0_3] : memref<32x64xf32, #tpu.memory_space<vmem>>, vector<32x64xf32>
    %c0_4 = arith.constant 0 : index
    %c0_5 = arith.constant 0 : index
    %5 = vector.load %arg6[%c0_4, %c0_5] : memref<16x64xf32, #tpu.memory_space<vmem>>, vector<16x64xf32>
    %cst = arith.constant dense<0.000000e+00> : vector<16x64xf32>
    %6 = tpu.matmul %3, %4, %cst {dimension_numbers = #tpu.dot_dimension_numbers<[1], [0], [0], [1], [0, 0, 1, 1], [], []>} : vector<16x32xf32>, vector<32x64xf32>, vector<16x64xf32> -> vector<16x64xf32>
    %7 = arith.addf %5, %6 : vector<16x64xf32>
    %c0_6 = arith.constant 0 : index
    %c0_7 = arith.constant 0 : index
    %8 = vector.load %arg6[%c0_6, %c0_7] : memref<16x64xf32, #tpu.memory_space<vmem>>, vector<16x64xf32>
    tpu.vector_store %arg6[%c0_6, %c0_7], %7 {strides = array<i32>} : memref<16x64xf32, #tpu.memory_space<vmem>>, vector<16x64xf32>,
    return
  }
  func.func @transform_0(%arg0: i32, %arg1: i32, %arg2: i32) -> (i32, i32) {
    %c0_i32 = arith.constant 0 : i32
    return %arg0, %arg2 : i32, i32
  }
  func.func @transform_1(%arg0: i32, %arg1: i32, %arg2: i32) -> (i32, i32) {
    %c0_i32 = arith.constant 0 : i32
    return %arg2, %arg1 : i32, i32
  }
  func.func @transform_2(%arg0: i32, %arg1: i32, %arg2: i32) -> (i32, i32) {
    %c0_i32 = arith.constant 0 : i32
    %c0_i32_0 = arith.constant 0 : i32
    return %c0_i32, %arg1 : i32, i32
  }
  func.func @transform_3(%arg0: i32, %arg1: i32, %arg2: i32) -> (i32, i32) {
    %c0_i32 = arith.constant 0 : i32
    return %arg0, %arg1 : i32, i32
  }
}

</mosaic_0001>

<llo_original>
// kernel: tpu_custom_call.1
$region0: #{tpu_custom_call.1}
  #allocation0 [shape = 'u32[]', space=smem, size = 0x4, offset = 0x4, fixed_abs, tag = 'smem constant byte address 0x4 - core index']
  #allocation1 [shape = 'u32[144,128]{1,0:T(1,128)}', space=vmem, size = 0x12000, scoped, tag = 'internal scratch']
  %s0 = inlined_call_operand.hbm [shape: f32[16,32], index: 0, kind: input, shape index: {}]
  %s1 = inlined_call_operand.hbm [shape: f32[32,64], index: 1, kind: input, shape index: {}]
  %s2 = inlined_call_operand.vmem [shape: f32[1,64], index: 2, kind: input, shape index: {}]
  %s3 = inlined_call_operand.hbm [shape: f32[16,64], index: 3, kind: output, shape index: {}]
  %s4 = sld [smem:[#allocation0]]
  $region34: #{tpu_custom_call.1} parent=0
    _
  %s6 = ssub.s32 1, %s4
  %s7 = scalar_select 0, %s6, %s4
  $region1: #{tpu_custom_call.1} parent=0
    #allocation2 [shape = 'u8[8192]{0}', space=vmem, size = 0x2000, scoped, tag = 'input window, operand 0, single buffered']
    #allocation3 [shape = 's32[1]{0}', space=sflag, size = 0x4, scoped, tag = 'scoped memory for tpu_custom_call.1']
    #allocation4 [shape = 's32[1]{0}', space=sflag, size = 0x4, scoped, tag = 'scoped memory for tpu_custom_call.1']
    #allocation5 [shape = 'u8[16384]{0}', space=vmem, size = 0x4000, scoped, tag = 'input window, operand 1, single buffered']
    #allocation6 [shape = 's32[1]{0}', space=sflag, size = 0x4, scoped, tag = 'scoped memory for tpu_custom_call.1']
    #allocation7 [shape = 'u8[8192]{0}', space=vmem, size = 0x2000, scoped, tag = 'output window, operand 0, single buffered']
    %8 = vsyncpa [#allocation3], 0
    %9 = vsyncpa [#allocation6], 0
    %10 = vsyncpa [#allocation4], 0
    // Predicated region
    $region2: #{tpu_custom_call.1} parent=1 // pred_check
      _
    $region3: #{tpu_custom_call.1} parent=1 // pred_check_branch
      %12 = sbr.rel (0) target = $region5
    $region4: #{tpu_custom_call.1} parent=1 // pred_region
      %s14 = ssub.s32 256, 256
      %15 = vsyncadd [#allocation3], %s14
      %s16 = sshll.u32 [#allocation2], 4
      %s17 = int_to_ptr.vmem [resolvable:$true] %s16
      %22 = dma.hbm_to_vmem [thread:$0]  %s0, 256, %s17, [#allocation3], 128, 128, 8
    $region5: #{tpu_custom_call.1} parent=1 // pred_fallthru
      _
    // Predicated region
    $region6: #{tpu_custom_call.1} parent=1 // pred_check
      _
    $region7: #{tpu_custom_call.1} parent=1 // pred_check_branch
      %24 = sbr.rel (0) target = $region9
    $region8: #{tpu_custom_call.1} parent=1 // pred_region
      %s26 = ssub.s32 512, 512
      %27 = vsyncadd [#allocation6], %s26
      %s28 = sshll.u32 [#allocation5], 4
      %s29 = int_to_ptr.vmem [resolvable:$true] %s28
      %34 = dma.hbm_to_vmem [thread:$0]  %s1, 512, %s29, [#allocation6], 128, 128, 8
    $region9: #{tpu_custom_call.1} parent=1 // pred_fallthru
      _
    // Predicated region
    $region10: #{tpu_custom_call.1} parent=1 // pred_check
      _
    $region11: #{tpu_custom_call.1} parent=1 // pred_check_branch
      %36 = sbr.rel (0) target = $region13
    $region12: #{tpu_custom_call.1} parent=1 // pred_region
      _
    $region13: #{tpu_custom_call.1} parent=1 // pred_fallthru
      _
    // Predicated region
    $region14: #{tpu_custom_call.1} parent=1 // pred_check
      _
    $region15: #{tpu_custom_call.1} parent=1 // pred_check_branch
      %38 = sbr.rel (0) target = $region17
    $region16: #{tpu_custom_call.1} parent=1 // pred_region
      %39 = dma.done [#allocation3], 256
    $region17: #{tpu_custom_call.1} parent=1 // pred_fallthru
      _
    // Predicated region
    $region18: #{tpu_custom_call.1} parent=1 // pred_check
      _
    $region19: #{tpu_custom_call.1} parent=1 // pred_check_branch
      %41 = sbr.rel (0) target = $region21
    $region20: #{tpu_custom_call.1} parent=1 // pred_region
      %42 = dma.done [#allocation6], 512
    $region21: #{tpu_custom_call.1} parent=1 // pred_fallthru
      _
    %p43 = scmp.eq.s32.totalorder 0, 0
    // Predicated region
    $region22: #{tpu_custom_call.1} parent=1 // pred_check
      %p44 = pneg %p43
    $region23: #{tpu_custom_call.1} parent=1 // pred_check_branch
      %46 = sbr.rel (%p44) target = $region25
    $region24: #{tpu_custom_call.1} parent=1 // pred_region
      %v47 = vld [vmem:[%s2] sm:$0x1]
      %v49 = vlaneseq
      %v50 = vshrl.u32 %v49, 7
      %v51 = vsub.s32 0, %v50
      %v52 = vrot.slane %v47, %v51
      %vm54 = vcmask 523264
      %55 = vst.msk [vmem:[#allocation7] sm:$0xff] %vm54, %v52
      %56 = vst.msk [vmem:[#allocation7 + $0x8] sm:$0xff] %vm54, %v52
    $region25: #{tpu_custom_call.1} parent=1 // pred_fallthru
      _
    %v57 = vld [vmem:[#allocation2] sm:$0xff]
    %v58 = vld [vmem:[#allocation2 + $0x8] sm:$0xff]
    %v59 = vld [vmem:[#allocation5] sm:$0xff]
    %v60 = vld [vmem:[#allocation5 + $0x8] sm:$0xff]
    %v61 = vld [vmem:[#allocation5 + $0x10] sm:$0xff]
    %v62 = vld [vmem:[#allocation5 + $0x18] sm:$0xff]
    %v63 = vld [vmem:[#allocation7] sm:$0xff]
    %v64 = vld [vmem:[#allocation7 + $0x8] sm:$0xff]
    %vm65 = vcmask 261120
    %v67 = vsel %vm65, %v57, 0
    %v70 = vsel %vm65, %v58, 0
    %72 = vmatprep.subr.mxu0 0.0
    %73 = vmatpush1.msra.mxu0 0.0
    %74 = vmatprep.subr.mxu0 0.0
    %75 = vmatpush1.msra.mxu0 0.0
    %76 = vmatprep.subr.mxu0 0.0
    %77 = vmatpush1.msra.mxu0 0.0
    %78 = vmatprep.subr.mxu0 0.0
    %79 = vmatpush1.msra.mxu0 0.0
    %80 = vmatprep.subr.mxu0 0.0
    %81 = vmatpush1.msra.mxu0 0.0
    %82 = vmatprep.subr.mxu0 0.0
    %83 = vmatpush1.msra.mxu0 0.0
    %84 = vmatprep.subr.mxu0 0.0
    %85 = vmatpush1.msra.mxu0 0.0
    %86 = vmatprep.subr.mxu0 0.0
    %87 = vmatpush1.msra.mxu0 0.0
    %88 = vmatprep.subr.mxu0 0.0
    %89 = vmatpush1.msra.mxu0 0.0
    %90 = vmatprep.subr.mxu0 0.0
    %91 = vmatpush1.msra.mxu0 0.0
    %92 = vmatprep.subr.mxu0 0.0
    %93 = vmatpush1.msra.mxu0 0.0
    %94 = vmatprep.subr.mxu0 0.0
    %95 = vmatpush1.msra.mxu0 0.0
    %96 = vmatprep.subr.mxu0 0.0
    %97 = vmatpush1.msra.mxu0 %v62
    %98 = vmatprep.subr.mxu0 0.0
    %99 = vmatpush1.msra.mxu0 %v61
    %100 = vmatprep.subr.mxu0 0.0
    %101 = vmatpush1.msra.mxu0 %v60
    %102 = vmatprep.subr.mxu0 0.0
    %103 = vmatpush1.msra.mxu0 %v59
    %104 = vmatprep.subr.mxu0 0.0
    %105 = vmatpush2.msra.mxu0 0.0
    %106 = vmatprep.subr.mxu0 0.0
    %107 = vmatpush2.msra.mxu0 0.0
    %108 = vmatprep.subr.mxu0 0.0
    %109 = vmatpush2.msra.mxu0 0.0
    %110 = vmatprep.subr.mxu0 0.0
    %111 = vmatpush2.msra.mxu0 0.0
    %112 = vmatprep.subr.mxu0 0.0
    %113 = vmatpush2.msra.mxu0 0.0
    %114 = vmatprep.subr.mxu0 0.0
    %115 = vmatpush2.msra.mxu0 0.0
    %116 = vmatprep.subr.mxu0 0.0
    %117 = vmatpush2.msra.mxu0 0.0
    %118 = vmatprep.subr.mxu0 0.0
    %119 = vmatpush2.msra.mxu0 0.0
    %120 = vmatprep.subr.mxu0 0.0
    %121 = vmatpush2.msra.mxu0 0.0
    %122 = vmatprep.subr.mxu0 0.0
    %123 = vmatpush2.msra.mxu0 0.0
    %124 = vmatprep.subr.mxu0 0.0
    %125 = vmatpush2.msra.mxu0 0.0
    %126 = vmatprep.subr.mxu0 0.0
    %127 = vmatpush2.msra.mxu0 0.0
    %128 = vmatprep.subr.mxu0 0.0
    %129 = vmatpush2.msra.mxu0 0.0
    %130 = vmatprep.subr.mxu0 0.0
    %131 = vmatpush2.msra.mxu0 0.0
    %132 = vmatprep.subr.mxu0 0.0
    %133 = vmatpush2.msra.mxu0 0.0
    %134 = vmatprep.subr.mxu0 0.0
    %135 = vmatpush2.msra.mxu0 0.0
    %136 = vmatprep.mubr.f32.mxu0 0.0
    %137 = vmatmul.mubr.f32.gmra.mxu0 %v67
    %v138 = vpop.f32.mrf.mxu0
    %v139 = vadd.f32 0.0, %v138
    %v140 = vpop.f32.mrf.mxu0
    %141 = vmatprep.mubr.f32.mxu0 0.0
    %142 = vmatmul.mubr.f32.gmra.mxu0 %v70
    %v143 = vpop.f32.mrf.mxu0
    %v144 = vadd.f32 0.0, %v143
    %v145 = vpop.f32.mrf.mxu0
    %146 = vdwg.mxu0
    %v147 = vadd.f32 %v63, %v139
    %v148 = vadd.f32 %v64, %v144
    %vm149 = vcmask 523264
    %150 = vst.msk [vmem:[#allocation7] sm:$0xff] %vm149, %v147
    %151 = vst.msk [vmem:[#allocation7 + $0x8] sm:$0xff] %vm149, %v148
    // Predicated region
    $region26: #{tpu_custom_call.1} parent=1 // pred_check
      _
    $region27: #{tpu_custom_call.1} parent=1 // pred_check_branch
      %153 = sbr.rel (0) target = $region29
    $region28: #{tpu_custom_call.1} parent=1 // pred_region
      %s155 = ssub.s32 256, 256
      %156 = vsyncadd [#allocation4], %s155
      %s157 = sshll.u32 [#allocation7], 4
      %s158 = int_to_ptr.vmem [resolvable:$true] %s157
      %163 = dma.vmem_to_hbm [thread:$0]  %s158, 256, %s3, [#allocation4], 128, 128, 8
    $region29: #{tpu_custom_call.1} parent=1 // pred_fallthru
      _
    // Predicated region
    $region30: #{tpu_custom_call.1} parent=1 // pred_check
      _
    $region31: #{tpu_custom_call.1} parent=1 // pred_check_branch
      %165 = sbr.rel (0) target = $region33
    $region32: #{tpu_custom_call.1} parent=1 // pred_region
      %166 = dma.done [#allocation4], 256
    $region33: #{tpu_custom_call.1} parent=1 // pred_fallthru
      _
    %167 = vsyncpa [#allocation3], 1
    %168 = vsyncpa [#allocation6], 1
    %169 = vsyncpa [#allocation4], 1

</llo_original>
